<compile_context>
chip_gen: v7x
topology: tpu7x:2x2x1
jax: 0.10.0
libtpu: 0.0.40
codegen_flags: <defaults>
</compile_context>

<pallas_src>
import math

import numpy as np

import jax
import jax.numpy as jnp
from jax.experimental import pallas as pl
from jax.experimental.pallas import tpu as pltpu

_MIB = 1024 * 1024


# --------------------------------------------------------------------------------------
# Host-side (float64 numpy) construction of the fused linear operator.
# --------------------------------------------------------------------------------------
def _dht_factors(n):
    """(C, S) with C[u,m] = cos(2*pi*u*m/n)/sqrt(n), S[u,m] = sin(...)/sqrt(n)."""
    idx = np.arange(n, dtype=np.float64)
    ang = 2.0 * np.pi * np.outer(idx, idx) / float(n)
    scale = 1.0 / math.sqrt(float(n))
    return np.cos(ang) * scale, np.sin(ang) * scale


def _crop_indices(full, out):
    """Row/col indices kept by _spectral_crop (full -> out)."""
    cutoff = math.ceil(out / 2)
    tail = out - cutoff                      # == cutoff for even out, cutoff-1 for odd out
    top = list(range(cutoff))
    bottom = list(range(full - tail, full)) if tail > 0 else []
    # TODO(synk): out == 1 hits a `[-0:]` quirk in the PyTorch reference; not replicated.
    return np.array(top + bottom, dtype=np.int64)


def _fused_operator_t(H, W, h, w, out_pad):
    """K^T of shape (H*W, out_pad), f32; columns beyond h*w are exact zeros (lane pad)."""
    Ch, Sh = _dht_factors(H)
    Cw, Sw = _dht_factors(W)
    rows = _crop_indices(H, h)
    cols = _crop_indices(W, w)
    A1, A2 = Ch[rows, :], Sh[rows, :]                        # (h, H)
    B1, B2 = (Cw + Sw)[cols, :], (Cw - Sw)[cols, :]          # (w, W)
    K1 = np.kron(A1, B1) + np.kron(A2, B2)                   # (h*w, H*W)  DHT #1 + crop
    Ch2, Sh2 = _dht_factors(h)
    Cw2, Sw2 = _dht_factors(w)
    K2 = np.kron(Ch2, Cw2 + Sw2) + np.kron(Sh2, Cw2 - Sw2)   # (h*w, h*w)  DHT #2
    K = K2 @ K1                                              # (h*w, H*W)
    Kt = np.zeros((H * W, out_pad), dtype=np.float64)
    Kt[:, : h * w] = K.T
    return jnp.asarray(Kt, dtype=jnp.float32)


# --------------------------------------------------------------------------------------
# Tile / VMEM sizing.
# --------------------------------------------------------------------------------------
def _tpu_vmem_capacity():
    try:
        return int(pltpu.get_tpu_info().vmem_capacity_bytes)
    except Exception:
        return 64 * _MIB                      # v7x per-TensorCore; most conservative


def _choose_batch_tile(B, in_row_bytes, out_row_bytes, kt_resident, vmem_cap):
    """Images per grid step (multiple of 8 sublanes), from the actual resident set."""
    budget = int(min(0.6 * vmem_cap, 80 * _MIB)) - kt_resident
    per_row = 2 * (in_row_bytes + out_row_bytes)              # double-buffered in + out
    tb = max(8, (max(budget, 8 * per_row) // per_row) // 8 * 8)
    # Gains plateau once the per-step input DMA is a few MiB (~85% of HBM roofline).
    tb = min(tb, max(8, (8 * _MIB // max(in_row_bytes, 1)) // 8 * 8))
    tb = min(tb, pl.cdiv(B, 8) * 8)
    # Keep >= 6 grid steps when the batch allows: >= 3 per TensorCore on v7x so the
    # software pipeline still overlaps DMA with compute on each core.
    if pl.cdiv(B, tb) < 6:
        tb = max(8, pl.cdiv(pl.cdiv(B, 6), 8) * 8)
    return tb


# --------------------------------------------------------------------------------------
# Pallas kernel: one lane-dense MXU matmul per batch tile.
# --------------------------------------------------------------------------------------
def _spectral_pool_kernel(kt_ref, x_ref, o_ref):
    # Whole forward (DHT -> crop -> DHT) for TB images at once:
    #   (TB, H*W) @ (H*W, out_pad) -> (TB, out_pad)
    x = x_ref[...].astype(jnp.float32)        # no-op for f32; cheap VPU cast for bf16
    acc = jnp.dot(x, kt_ref[...], preferred_element_type=jnp.float32)
    o_ref[...] = acc.astype(o_ref.dtype)      # emit in the caller's dtype directly


def spectral_pool2d(x, scale_factor):
    """x: (N, C, H, W); returns (N, C, ceil(H*sf_h), ceil(W*sf_w)) with x's dtype."""
    if isinstance(scale_factor, (tuple, list)):
        sf_h, sf_w = scale_factor
    else:
        sf_h = sf_w = scale_factor

    N, C, H, W = x.shape
    h = math.ceil(H * sf_h)
    w = math.ceil(W * sf_w)
    if h > H or w > W:
        raise ValueError("spectral_pool2d: scale_factor > 1 (spectral upsampling) "
                         "is not supported by the pooling kernel")

    in_px = H * W
    out_px = h * w
    out_pad = pl.cdiv(out_px, 128) * 128      # lane-dense stores: pad K^T with zero cols

    kt_bytes = 4 * in_px * out_pad
    if kt_bytes > 8 * _MIB:
        # TODO(synk): separable two-stage (per-axis DHT) path for large spatial dims.
        raise NotImplementedError(
            "spectral_pool2d Pallas kernel: spatial dims too large for the fused operator")

    kt = _fused_operator_t(H, W, h, w, out_pad)    # (in_px, out_pad) f32, grid-invariant

    B = N * C
    orig_dtype = x.dtype
    # Native bf16 / f32 I/O fast path (f32 accumulation happens inside the kernel).
    io_dtype = orig_dtype if orig_dtype in (jnp.float32, jnp.bfloat16) else jnp.float32
    xr = x.reshape(B, in_px)                        # free reshape: no pad, no copy
    if xr.dtype != io_dtype:
        xr = xr.astype(io_dtype)
    io_bytes = jnp.dtype(io_dtype).itemsize

    vmem_cap = _tpu_vmem_capacity()

    # Single-buffer the grid-invariant operator when it is big enough to matter.
    single_buffer_kt = kt_bytes >= 2 * _MIB and hasattr(pl, "Buffered")
    kt_resident = kt_bytes if single_buffer_kt else 2 * kt_bytes

    tb = _choose_batch_tile(B, in_px * io_bytes, out_pad * io_bytes, kt_resident, vmem_cap)
    grid = pl.cdiv(B, tb)     # ragged last tile: Pallas clips boundary-block DMAs, no pad

    # Honest VMEM request: actual resident buffers + fixed headroom, within the chip cap.
    vmem_need = kt_resident + 2 * tb * (in_px + out_pad) * io_bytes + 4 * _MIB
    vmem_limit = int(max(32 * _MIB, min(vmem_need, int(0.85 * vmem_cap))))

    kt_kwargs = {"pipeline_mode": pl.Buffered(1)} if single_buffer_kt else {}

    out = pl.pallas_call(
        _spectral_pool_kernel,
        out_shape=jax.ShapeDtypeStruct((B, out_pad), io_dtype),
        grid_spec=pltpu.PrefetchScalarGridSpec(
            num_scalar_prefetch=0,
            grid=(grid,),
            in_specs=[
                # Fused operator: constant index_map => fetched into VMEM only once.
                pl.BlockSpec((in_px, out_pad), lambda i: (0, 0), **kt_kwargs),
                # Tile of TB flattened images (batch in the sublane/M dimension).
                pl.BlockSpec((tb, in_px), lambda i: (i, 0)),
            ],
            out_specs=pl.BlockSpec((tb, out_pad), lambda i: (i, 0)),
        ),
        compiler_params=pltpu.CompilerParams(
            dimension_semantics=("parallel",),
            vmem_limit_bytes=vmem_limit),
    )(kt, xr)

    y = out[:, :out_px].reshape(N, C, h, w)
    if y.dtype != orig_dtype:
        y = y.astype(orig_dtype)
    return y


# --------------------------------------------------------------------------------------
# Pure-JAX reference (mirrors the PyTorch module).
# --------------------------------------------------------------------------------------
def _dht_ref(x):
    f = jnp.fft.fft2(x, norm="ortho")
    return f.real - f.imag


def _spectral_pool2d_ref(x, scale_factor):
    if isinstance(scale_factor, (tuple, list)):
        sf_h, sf_w = scale_factor
    else:
        sf_h = sf_w = scale_factor
    N, C, H, W = x.shape
    h = math.ceil(H * sf_h)
    w = math.ceil(W * sf_w)
    d = _dht_ref(x)
    rows = jnp.asarray(_crop_indices(H, h))
    cols = jnp.asarray(_crop_indices(W, w))
    cropped = d[:, :, rows, :][:, :, :, cols]
    return _dht_ref(cropped)


if __name__ == "__main__":
    key = jax.random.PRNGKey(0)
    N, C, H, W = 2, 4, 16, 16
    scale = 0.5
    x = jax.random.normal(key, (N, C, H, W), dtype=jnp.float32)

    y = jax.block_until_ready(spectral_pool2d(x, scale))

    y_ref = _spectral_pool2d_ref(x, scale)
    assert y.shape == y_ref.shape, (y.shape, y_ref.shape)
    max_err = float(jnp.max(jnp.abs(y - y_ref)))
    assert jnp.allclose(y, y_ref, atol=2e-3, rtol=2e-3), max_err

    print("KERNEL_OK")
</pallas_src>

<mosaic_0001>
module attributes {stable_mosaic.version = 11 : i64} {
  func.func @_spectral_pool_kernel(%arg0: i32, %arg1: memref<256x128xf32, #tpu.memory_space<vmem>>, %arg2: memref<8x256xf32, #tpu.memory_space<vmem>>, %arg3: memref<8x128xf32, #tpu.memory_space<vmem>>) attributes {dimension_semantics = [#tpu.dimension_semantics<parallel>], iteration_bounds = array<i64: 1>, scalar_prefetch = 0 : i64, scratch_operands = 0 : i64, tpu.core_type = #tpu.core_type<tc>, window_params = [{pipeline_mode = #tpu.pipeline_mode<synchronous>, transform_indices = @transform_0, window_bounds = array<i64: 256, 128>}, {transform_indices = @transform_1, window_bounds = array<i64: 8, 256>}, {transform_indices = @transform_2, window_bounds = array<i64: 8, 128>}]} {
    %c0 = arith.constant 0 : index
    %c0_0 = arith.constant 0 : index
    %0 = vector.load %arg2[%c0, %c0_0] : memref<8x256xf32, #tpu.memory_space<vmem>>, vector<8x256xf32>
    %c0_1 = arith.constant 0 : index
    %c0_2 = arith.constant 0 : index
    %1 = vector.load %arg1[%c0_1, %c0_2] : memref<256x128xf32, #tpu.memory_space<vmem>>, vector<256x128xf32>
    %cst = arith.constant dense<0.000000e+00> : vector<8x128xf32>
    %2 = tpu.matmul %0, %1, %cst {dimension_numbers = #tpu.dot_dimension_numbers<[1], [0], [0], [1], [0, 0, 1, 1], [], []>} : vector<8x256xf32>, vector<256x128xf32>, vector<8x128xf32> -> vector<8x128xf32>
    %c0_3 = arith.constant 0 : index
    %c0_4 = arith.constant 0 : index
    %3 = vector.load %arg3[%c0_3, %c0_4] : memref<8x128xf32, #tpu.memory_space<vmem>>, vector<8x128xf32>
    tpu.vector_store %arg3[%c0_3, %c0_4], %2 {strides = array<i32>} : memref<8x128xf32, #tpu.memory_space<vmem>>, vector<8x128xf32>,
    return
  }
  func.func @transform_0(%arg0: i32) -> (i32, i32) {
    %c0_i32 = arith.constant 0 : i32
    %c0_i32_0 = arith.constant 0 : i32
    %c0_i32_1 = arith.constant 0 : i32
    return %c0_i32, %c0_i32_0 : i32, i32
  }
  func.func @transform_1(%arg0: i32) -> (i32, i32) {
    %c0_i32 = arith.constant 0 : i32
    %c0_i32_0 = arith.constant 0 : i32
    return %arg0, %c0_i32 : i32, i32
  }
  func.func @transform_2(%arg0: i32) -> (i32, i32) {
    %c0_i32 = arith.constant 0 : i32
    %c0_i32_0 = arith.constant 0 : i32
    return %arg0, %c0_i32 : i32, i32
  }
}

</mosaic_0001>

<llo_original>
// kernel: tpu_custom_call.1
$region0: #{tpu_custom_call.1}
  #allocation0 [shape = 'u32[]', space=smem, size = 0x4, offset = 0x4, fixed_abs, tag = 'smem constant byte address 0x4 - core index']
  #allocation1 [shape = 'u32[144,128]{1,0:T(1,128)}', space=vmem, size = 0x12000, scoped, tag = 'internal scratch']
  %s0 = inlined_call_operand.hbm [shape: f32[256,128], index: 0, kind: input, shape index: {}]
  %s1 = inlined_call_operand.hbm [shape: f32[8,256], index: 1, kind: input, shape index: {}]
  %s2 = inlined_call_operand.hbm [shape: f32[8,128], index: 2, kind: output, shape index: {}]
  %s3 = sld [smem:[#allocation0]]
  $region26: #{tpu_custom_call.1} parent=0
    _
  %s5 = ssub.s32 1, %s3
  %s6 = scalar_select 0, %s5, %s3
  $region1: #{tpu_custom_call.1} parent=0
    #allocation2 [shape = 'u8[131072]{0}', space=vmem, size = 0x20000, scoped, tag = 'input window, operand 0, single buffered']
    #allocation3 [shape = 's32[1]{0}', space=sflag, size = 0x4, scoped, tag = 'scoped memory for tpu_custom_call.1']
    #allocation4 [shape = 's32[1]{0}', space=sflag, size = 0x4, scoped, tag = 'scoped memory for tpu_custom_call.1']
    #allocation5 [shape = 'u8[8192]{0}', space=vmem, size = 0x2000, scoped, tag = 'input window, operand 1, single buffered']
    #allocation6 [shape = 's32[1]{0}', space=sflag, size = 0x4, scoped, tag = 'scoped memory for tpu_custom_call.1']
    #allocation7 [shape = 'u8[4096]{0}', space=vmem, size = 0x1000, scoped, tag = 'output window, operand 0, single buffered']
    %7 = vsyncpa [#allocation3], 0
    %8 = vsyncpa [#allocation6], 0
    %9 = vsyncpa [#allocation4], 0
    // Predicated region
    $region2: #{tpu_custom_call.1} parent=1 // pred_check
      _
    $region3: #{tpu_custom_call.1} parent=1 // pred_check_branch
      %11 = sbr.rel (0) target = $region5
    $region4: #{tpu_custom_call.1} parent=1 // pred_region
      %s13 = ssub.s32 4096, 4096
      %14 = vsyncadd [#allocation3], %s13
      %s15 = sshll.u32 [#allocation2], 4
      %s16 = int_to_ptr.vmem [resolvable:$true] %s15
      %21 = dma.hbm_to_vmem [thread:$0]  %s0, 4096, %s16, [#allocation3], 128, 128, 8
    $region5: #{tpu_custom_call.1} parent=1 // pred_fallthru
      _
    // Predicated region
    $region6: #{tpu_custom_call.1} parent=1 // pred_check
      _
    $region7: #{tpu_custom_call.1} parent=1 // pred_check_branch
      %23 = sbr.rel (0) target = $region9
    $region8: #{tpu_custom_call.1} parent=1 // pred_region
      %s25 = ssub.s32 256, 256
      %26 = vsyncadd [#allocation6], %s25
      %s28 = sshll.u32 [#allocation5], 4
      %s29 = int_to_ptr.vmem [resolvable:$true] %s28
      %31 = dma.hbm_to_vmem [thread:$0]  %s1, 256, %s29, [#allocation6]
    $region9: #{tpu_custom_call.1} parent=1 // pred_fallthru
      _
    // Predicated region
    $region10: #{tpu_custom_call.1} parent=1 // pred_check
      _
    $region11: #{tpu_custom_call.1} parent=1 // pred_check_branch
      %33 = sbr.rel (0) target = $region13
    $region12: #{tpu_custom_call.1} parent=1 // pred_region
      %34 = dma.done [#allocation3], 4096
    $region13: #{tpu_custom_call.1} parent=1 // pred_fallthru
      _
    // Predicated region
    $region14: #{tpu_custom_call.1} parent=1 // pred_check
      _
    $region15: #{tpu_custom_call.1} parent=1 // pred_check_branch
      %36 = sbr.rel (0) target = $region17
    $region16: #{tpu_custom_call.1} parent=1 // pred_region
      %37 = dma.done [#allocation6], 256
    $region17: #{tpu_custom_call.1} parent=1 // pred_fallthru
      _
    %v38 = vld [vmem:[#allocation5] sm:$0xff]
    %v39 = vld [vmem:[#allocation5 + $0x8] sm:$0xff]
    %v40 = vld [vmem:[#allocation2] sm:$0xff]
    %v41 = vld [vmem:[#allocation2 + $0x8] sm:$0xff]
    %v42 = vld [vmem:[#allocation2 + $0x10] sm:$0xff]
    %v43 = vld [vmem:[#allocation2 + $0x18] sm:$0xff]
    %v44 = vld [vmem:[#allocation2 + $0x20] sm:$0xff]
    %v45 = vld [vmem:[#allocation2 + $0x28] sm:$0xff]
    %v46 = vld [vmem:[#allocation2 + $0x30] sm:$0xff]
    %v47 = vld [vmem:[#allocation2 + $0x38] sm:$0xff]
    %v48 = vld [vmem:[#allocation2 + $0x40] sm:$0xff]
    %v49 = vld [vmem:[#allocation2 + $0x48] sm:$0xff]
    %v50 = vld [vmem:[#allocation2 + $0x50] sm:$0xff]
    %v51 = vld [vmem:[#allocation2 + $0x58] sm:$0xff]
    %v52 = vld [vmem:[#allocation2 + $0x60] sm:$0xff]
    %v53 = vld [vmem:[#allocation2 + $0x68] sm:$0xff]
    %v54 = vld [vmem:[#allocation2 + $0x70] sm:$0xff]
    %v55 = vld [vmem:[#allocation2 + $0x78] sm:$0xff]
    %v56 = vld [vmem:[#allocation2 + $0x80] sm:$0xff]
    %v57 = vld [vmem:[#allocation2 + $0x88] sm:$0xff]
    %v58 = vld [vmem:[#allocation2 + $0x90] sm:$0xff]
    %v59 = vld [vmem:[#allocation2 + $0x98] sm:$0xff]
    %v60 = vld [vmem:[#allocation2 + $0xa0] sm:$0xff]
    %v61 = vld [vmem:[#allocation2 + $0xa8] sm:$0xff]
    %v62 = vld [vmem:[#allocation2 + $0xb0] sm:$0xff]
    %v63 = vld [vmem:[#allocation2 + $0xb8] sm:$0xff]
    %v64 = vld [vmem:[#allocation2 + $0xc0] sm:$0xff]
    %v65 = vld [vmem:[#allocation2 + $0xc8] sm:$0xff]
    %v66 = vld [vmem:[#allocation2 + $0xd0] sm:$0xff]
    %v67 = vld [vmem:[#allocation2 + $0xd8] sm:$0xff]
    %v68 = vld [vmem:[#allocation2 + $0xe0] sm:$0xff]
    %v69 = vld [vmem:[#allocation2 + $0xe8] sm:$0xff]
    %v70 = vld [vmem:[#allocation2 + $0xf0] sm:$0xff]
    %v71 = vld [vmem:[#allocation2 + $0xf8] sm:$0xff]
    %72 = vmatprep.subr.mxu0 0.0
    %73 = vmatpush1.msra.mxu0 %v40
    %74 = vmatprep.subr.mxu0 0.0
    %75 = vmatpush1.msra.mxu0 %v41
    %76 = vmatprep.subr.mxu0 0.0
    %77 = vmatpush1.msra.mxu0 %v42
    %78 = vmatprep.subr.mxu0 0.0
    %79 = vmatpush1.msra.mxu0 %v43
    %80 = vmatprep.subr.mxu0 0.0
    %81 = vmatpush1.msra.mxu0 %v44
    %82 = vmatprep.subr.mxu0 0.0
    %83 = vmatpush1.msra.mxu0 %v45
    %84 = vmatprep.subr.mxu0 0.0
    %85 = vmatpush1.msra.mxu0 %v46
    %86 = vmatprep.subr.mxu0 0.0
    %87 = vmatpush1.msra.mxu0 %v47
    %88 = vmatprep.subr.mxu0 0.0
    %89 = vmatpush1.msra.mxu0 %v48
    %90 = vmatprep.subr.mxu0 0.0
    %91 = vmatpush1.msra.mxu0 %v49
    %92 = vmatprep.subr.mxu0 0.0
    %93 = vmatpush1.msra.mxu0 %v50
    %94 = vmatprep.subr.mxu0 0.0
    %95 = vmatpush1.msra.mxu0 %v51
    %96 = vmatprep.subr.mxu0 0.0
    %97 = vmatpush1.msra.mxu0 %v52
    %98 = vmatprep.subr.mxu0 0.0
    %99 = vmatpush1.msra.mxu0 %v53
    %100 = vmatprep.subr.mxu0 0.0
    %101 = vmatpush1.msra.mxu0 %v54
    %102 = vmatprep.subr.mxu0 0.0
    %103 = vmatpush1.msra.mxu0 %v55
    %104 = vmatprep.subr.mxu0 0.0
    %105 = vmatpush1.msra.mxu0 %v56
    %106 = vmatprep.subr.mxu0 0.0
    %107 = vmatpush1.msra.mxu0 %v57
    %108 = vmatprep.subr.mxu0 0.0
    %109 = vmatpush1.msra.mxu0 %v58
    %110 = vmatprep.subr.mxu0 0.0
    %111 = vmatpush1.msra.mxu0 %v59
    %112 = vmatprep.subr.mxu0 0.0
    %113 = vmatpush1.msra.mxu0 %v60
    %114 = vmatprep.subr.mxu0 0.0
    %115 = vmatpush1.msra.mxu0 %v61
    %116 = vmatprep.subr.mxu0 0.0
    %117 = vmatpush1.msra.mxu0 %v62
    %118 = vmatprep.subr.mxu0 0.0
    %119 = vmatpush1.msra.mxu0 %v63
    %120 = vmatprep.subr.mxu0 0.0
    %121 = vmatpush1.msra.mxu0 %v64
    %122 = vmatprep.subr.mxu0 0.0
    %123 = vmatpush1.msra.mxu0 %v65
    %124 = vmatprep.subr.mxu0 0.0
    %125 = vmatpush1.msra.mxu0 %v66
    %126 = vmatprep.subr.mxu0 0.0
    %127 = vmatpush1.msra.mxu0 %v67
    %128 = vmatprep.subr.mxu0 0.0
    %129 = vmatpush1.msra.mxu0 %v68
    %130 = vmatprep.subr.mxu0 0.0
    %131 = vmatpush1.msra.mxu0 %v69
    %132 = vmatprep.subr.mxu0 0.0
    %133 = vmatpush1.msra.mxu0 %v70
    %134 = vmatprep.subr.mxu0 0.0
    %135 = vmatpush1.msra.mxu0 %v71
    %136 = vmatprep.mubr.f32.mxu0 %v39
    %137 = vmatmul.mubr.f32.gmra.mrb[0].mxu0 %v38
    %v138 = vpop.f32.mrb[0].mxu0
    %v139 = vadd.f32 0.0, %v138
    %v140 = vpop.f32.mrb[0].mxu0
    %141 = vdwg.mxu0
    %142 = vst [vmem:[#allocation7] sm:$0xff] %v139
    // Predicated region
    $region18: #{tpu_custom_call.1} parent=1 // pred_check
      _
    $region19: #{tpu_custom_call.1} parent=1 // pred_check_branch
      %144 = sbr.rel (0) target = $region21
    $region20: #{tpu_custom_call.1} parent=1 // pred_region
      %s146 = ssub.s32 128, 128
      %147 = vsyncadd [#allocation4], %s146
      %s149 = sshll.u32 [#allocation7], 4
      %s150 = int_to_ptr.vmem [resolvable:$true] %s149
      %152 = dma.vmem_to_hbm [thread:$0]  %s150, 128, %s2, [#allocation4]
    $region21: #{tpu_custom_call.1} parent=1 // pred_fallthru
      _
    // Predicated region
    $region22: #{tpu_custom_call.1} parent=1 // pred_check
      _
    $region23: #{tpu_custom_call.1} parent=1 // pred_check_branch
      %154 = sbr.rel (0) target = $region25
    $region24: #{tpu_custom_call.1} parent=1 // pred_region
      %155 = dma.done [#allocation4], 128
    $region25: #{tpu_custom_call.1} parent=1 // pred_fallthru
      _
    %156 = vsyncpa [#allocation3], 1
    %157 = vsyncpa [#allocation6], 1
    %158 = vsyncpa [#allocation4], 1

</llo_original>
